<compile_context>
chip_gen: v7x
topology: tpu7x:2x2x1
jax: 0.10.0
libtpu: 0.0.40
codegen_flags: <defaults>
</compile_context>

<pallas_src>
import functools

import jax
import jax.numpy as jnp
from jax import lax
from jax.experimental import pallas as pl
from jax.experimental.pallas import tpu as pltpu


# ----------------------------- small helpers --------------------------------

def _round_up(x, m):
    return ((x + m - 1) // m) * m


def _cdiv(a, b):
    return (a + b - 1) // b


def _gelu_tanh(x):
    # torch.nn.functional.gelu(x, approximate='tanh'):
    #   0.5*x*(1 + tanh(sqrt(2/pi)*(x + 0.044715*x^3)))
    # identical to x * sigmoid(2*z); saves one VALU add/mul per element.
    c = 0.7978845608028654  # sqrt(2/pi)
    z = c * (x + 0.044715 * x * x * x)
    return x * jax.nn.sigmoid(2.0 * z)


def _tpu_kind():
    try:
        return jax.devices()[0].device_kind.lower()
    except Exception:
        return ""


def _vmem_capacity_bytes():
    try:
        return int(pltpu.get_tpu_info().vmem_capacity_bytes)
    except Exception:
        return 64 * 1024 * 1024  # conservative (v7x per-TC)


def _vmem_limit(need_bytes, cap_bytes):
    # actual requirement + 25% headroom, never the whole physical VMEM.
    limit = need_bytes * 5 // 4 + (2 << 20)
    limit = max(limit, 16 << 20)
    return int(min(limit, int(0.9 * cap_bytes)))


def _default_row_tile(streamed, kind):
    if not streamed:
        # weights are VMEM-resident -> arithmetic intensity is not limited by
        # weight streaming; 512 keeps temps small and amortizes per-step cost.
        return 512
    # streamed weights: intensity = tm FLOPs / weight byte, pick per gen.
    if "v6" in kind:
        return 768
    if "v7" in kind:
        return 512
    if "v5" in kind:
        return 384
    return 512


def _row_tiling(M, tm_max, kind):
    """Balanced row tiles: avoids ~2x padded work for awkward M."""
    n_tiles = max(1, _cdiv(M, tm_max))
    if "v7" in kind and n_tiles > 1 and n_tiles % 2 == 1:
        n_tiles += 1  # even i-tile count -> both TensorCores busy
    tm = max(8, _round_up(_cdiv(M, n_tiles), 8))
    M_pad = _round_up(M, tm)
    return tm, M_pad


def _streamed_k_tile(inner_pad128, tk_max):
    """Largest multiple-of-128 divisor of the (128-padded) inner dim <= tk_max
    -> zero extra inner padding in the streamed path."""
    n_lanes = inner_pad128 // 128
    best = 128
    for d in range(1, n_lanes + 1):
        if n_lanes % d == 0 and d * 128 <= tk_max:
            best = d * 128
    return best


def _k_slices(inner_pad, tk):
    slices, s = [], 0
    while s < inner_pad:
        size = min(tk, inner_pad - s)
        slices.append((s, size))
        s += size
    return tuple(slices)


# ------------------------------- kernels -------------------------------------

def _mlp_resident_kernel(x_ref, w1_ref, b1_ref, w2_ref, b2_ref, o_ref,
                         *, k_slices, precision):
    """Weights fully resident in VMEM; in-kernel loop over k chunks."""
    x = x_ref[...]
    acc = jnp.zeros((x.shape[0], o_ref.shape[1]), jnp.float32)
    for start, size in k_slices:  # static, 128-aligned slices of resident refs
        w1_blk = w1_ref[:, start:start + size]
        b1_blk = b1_ref[:, start:start + size]
        h = jnp.dot(x, w1_blk, preferred_element_type=jnp.float32,
                    precision=precision)
        h = _gelu_tanh(h + b1_blk)
        acc = acc + jnp.dot(h.astype(w2_ref.dtype),
                            w2_ref[start:start + size, :],
                            preferred_element_type=jnp.float32,
                            precision=precision)
    o_ref[...] = (acc + b2_ref[...]).astype(o_ref.dtype)


def _mlp_streamed_kernel(x_ref, w1_ref, b1_ref, w2_ref, b2_ref, o_ref, acc_ref,
                         *, precision):
    """Fallback: weights streamed in (hidden, tk)/(tk, hidden) tiles over the
    k grid axis; f32 VMEM accumulator; final step fused into the output."""
    k = pl.program_id(1)
    nk = pl.num_programs(1)

    @pl.when(k == 0)
    def _():
        acc_ref[...] = jnp.zeros_like(acc_ref)

    h = jnp.dot(x_ref[...], w1_ref[...], preferred_element_type=jnp.float32,
                precision=precision)
    h = _gelu_tanh(h + b1_ref[...])
    part = jnp.dot(h.astype(w2_ref.dtype), w2_ref[...],
                   preferred_element_type=jnp.float32, precision=precision)

    is_last = k == nk - 1

    @pl.when(jnp.logical_not(is_last))
    def _():
        acc_ref[...] += part

    @pl.when(is_last)
    def _():  # fuse last partial product + bias into the output store
        o_ref[...] = (acc_ref[...] + part + b2_ref[...]).astype(o_ref.dtype)


# ------------------------------- wrapper --------------------------------------

def prepare_siglip_mlp_params(w1, b1, w2, b2, compute_dtype):
    """Cast/pad the weights ONCE (call at model init, not per forward).

    w1: (hidden, inner) and w2: (inner, hidden) are stored transposed relative
    to the torch nn.Linear (out, in) layout so the kernel does plain matmuls.
    """
    hidden, inner = w1.shape
    inner_pad = _round_up(inner, 128)
    w1 = w1.astype(compute_dtype)
    w2 = w2.astype(compute_dtype)
    b1_2d = b1.reshape(1, inner).astype(jnp.float32)
    b2_2d = b2.reshape(1, hidden).astype(jnp.float32)
    if inner_pad != inner:
        # gelu(0 + 0) == 0 and padded w2 rows are zero, so padded inner
        # columns contribute nothing.
        w1 = jnp.pad(w1, ((0, 0), (0, inner_pad - inner)))
        b1_2d = jnp.pad(b1_2d, ((0, 0), (0, inner_pad - inner)))
        w2 = jnp.pad(w2, ((0, inner_pad - inner), (0, 0)))
    return dict(w1=w1, b1=b1_2d, w2=w2, b2=b2_2d,
                hidden=hidden, inner=inner, inner_pad=inner_pad)


def siglip_mlp(hidden_states, params, *, tk=512, weights_resident=None):
    """hidden_states: (..., hidden). Returns fc2(gelu_tanh(fc1(x)))."""
    orig_shape = hidden_states.shape
    hidden = params["hidden"]
    assert orig_shape[-1] == hidden
    inner_pad = params["inner_pad"]
    w1, b1, w2, b2 = params["w1"], params["b1"], params["w2"], params["b2"]

    x2d = hidden_states.reshape(-1, hidden)
    M = x2d.shape[0]
    cdtype = hidden_states.dtype
    if w1.dtype != cdtype:  # fallback only; normally prepared in cdtype already
        w1 = w1.astype(cdtype)
        w2 = w2.astype(cdtype)
    itemsize = jnp.dtype(cdtype).itemsize
    # float32 activations: explicit high precision (matches an f32 reference);
    # bf16 activations: native MXU path.
    precision = lax.Precision.HIGHEST if cdtype == jnp.float32 else None

    kind = _tpu_kind()
    vmem_cap = _vmem_capacity_bytes()
    tk = max(128, _round_up(tk, 128))

    # ---- strategy selection: resident weights whenever they fit in VMEM -----
    if weights_resident is None:
        tm_guess, _ = _row_tiling(M, _default_row_tile(False, kind), kind)
        resident_need = (
            2 * 2 * hidden * inner_pad * itemsize      # w1 + w2 (2 buffers each)
            + 2 * (inner_pad + hidden) * 4             # biases (f32)
            + 2 * 2 * tm_guess * hidden * itemsize     # x + out, double-buffered
            + tm_guess * min(tk, inner_pad) * 4        # gelu chunk (f32)
            + tm_guess * hidden * 4                    # accumulator (f32)
        )
        weights_resident = resident_need <= int(0.70 * vmem_cap)

    if weights_resident:
        tm, M_pad = _row_tiling(M, _default_row_tile(False, kind), kind)
        if M_pad != M:
            x2d = jnp.pad(x2d, ((0, M_pad - M), (0, 0)))
        grid = (M_pad // tm,)
        k_slices = _k_slices(inner_pad, min(tk, inner_pad))
        kernel = functools.partial(_mlp_resident_kernel,
                                   k_slices=k_slices, precision=precision)
        vmem_need = (
            2 * 2 * hidden * inner_pad * itemsize
            + 2 * (inner_pad + hidden) * 4
            + 2 * 2 * tm * hidden * itemsize
            + tm * min(tk, inner_pad) * 4
            + tm * hidden * 4
        )
        out = pl.pallas_call(
            kernel,
            out_shape=jax.ShapeDtypeStruct((M_pad, hidden), cdtype),
            grid_spec=pltpu.PrefetchScalarGridSpec(
                num_scalar_prefetch=0,
                grid=grid,
                in_specs=[
                    pl.BlockSpec((tm, hidden), lambda i: (i, 0)),          # x tile
                    pl.BlockSpec((hidden, inner_pad), lambda i: (0, 0)),   # w1 (resident)
                    pl.BlockSpec((1, inner_pad), lambda i: (0, 0)),        # b1 (resident)
                    pl.BlockSpec((inner_pad, hidden), lambda i: (0, 0)),   # w2 (resident)
                    pl.BlockSpec((1, hidden), lambda i: (0, 0)),           # b2 (resident)
                ],
                out_specs=pl.BlockSpec((tm, hidden), lambda i: (i, 0)),
            ),
            compiler_params=pltpu.CompilerParams(
                dimension_semantics=("parallel",),
                vmem_limit_bytes=_vmem_limit(vmem_need, vmem_cap),
            ),
        )(x2d, w1, b1, w2, b2)
    else:
        tm, M_pad = _row_tiling(M, _default_row_tile(True, kind), kind)
        if M_pad != M:
            x2d = jnp.pad(x2d, ((0, M_pad - M), (0, 0)))
        tk_eff = _streamed_k_tile(inner_pad, max(tk, 512))
        grid = (M_pad // tm, inner_pad // tk_eff)
        kernel = functools.partial(_mlp_streamed_kernel, precision=precision)
        vmem_need = (
            2 * 2 * tm * hidden * itemsize                       # x + out
            + 2 * 2 * hidden * tk_eff * itemsize                 # w1 + w2 tiles
            + 2 * (tk_eff + hidden) * 4                          # bias tiles
            + tm * hidden * 4                                    # acc scratch
            + tm * tk_eff * 4                                    # gelu temp
        )
        out = pl.pallas_call(
            kernel,
            out_shape=jax.ShapeDtypeStruct((M_pad, hidden), cdtype),
            grid_spec=pltpu.PrefetchScalarGridSpec(
                num_scalar_prefetch=0,
                grid=grid,
                in_specs=[
                    pl.BlockSpec((tm, hidden), lambda i, k: (i, 0)),       # x
                    pl.BlockSpec((hidden, tk_eff), lambda i, k: (0, k)),   # w1 chunk
                    pl.BlockSpec((1, tk_eff), lambda i, k: (0, k)),        # b1 chunk
                    pl.BlockSpec((tk_eff, hidden), lambda i, k: (k, 0)),   # w2 chunk
                    pl.BlockSpec((1, hidden), lambda i, k: (0, 0)),        # b2
                ],
                out_specs=pl.BlockSpec((tm, hidden), lambda i, k: (i, 0)),
                scratch_shapes=[pltpu.VMEM((tm, hidden), jnp.float32)],
            ),
            compiler_params=pltpu.CompilerParams(
                dimension_semantics=("parallel", "arbitrary"),
                vmem_limit_bytes=_vmem_limit(vmem_need, vmem_cap),
            ),
        )(x2d, w1, b1, w2, b2)

    if M_pad != M:
        out = out[:M]
    return out.reshape(orig_shape)


# --------------------------------- demo ---------------------------------------

if __name__ == "__main__":
    # Small shapes consistent with the module: (batch, seq, hidden_size).
    batch, seq, hidden_size, inner_dim = 2, 8, 32, 128
    key = jax.random.PRNGKey(0)
    kx, kw1, kb1, kw2, kb2 = jax.random.split(key, 5)

    # torch nn.Linear weight is (out, in); stored transposed here:
    #   fc1 -> w1 (hidden, inner), fc2 -> w2 (inner, hidden)
    w1 = (jax.random.normal(kw1, (hidden_size, inner_dim), jnp.float32)
          / hidden_size ** 0.5)
    b1 = jax.random.normal(kb1, (inner_dim,), jnp.float32) * 0.01
    w2 = (jax.random.normal(kw2, (inner_dim, hidden_size), jnp.float32)
          / inner_dim ** 0.5)
    b2 = jax.random.normal(kb2, (hidden_size,), jnp.float32) * 0.01

    # Cast/pad once (hoisted out of the per-forward path).
    params = prepare_siglip_mlp_params(w1, b1, w2, b2, jnp.float32)

    def ref_mlp(x):
        hp = lax.Precision.HIGHEST
        xf = x.reshape(-1, hidden_size).astype(jnp.float32)
        h = jnp.dot(xf, w1, precision=hp) + b1
        h = 0.5 * h * (1.0 + jnp.tanh(0.7978845608028654
                                      * (h + 0.044715 * h ** 3)))
        y = jnp.dot(h, w2, precision=hp) + b2
        return y.reshape(x.shape).astype(x.dtype)

    def check(x, **kw):
        out = jax.block_until_ready(siglip_mlp(x, params, **kw))
        ref = ref_mlp(x)
        assert out.shape == x.shape and out.dtype == x.dtype
        assert jnp.allclose(out.astype(jnp.float32), ref.astype(jnp.float32),
                            atol=5e-2, rtol=5e-2), "mismatch vs reference"

    # 1) primary path: weights resident in VMEM (auto-selected).
    x = jax.random.normal(kx, (batch, seq, hidden_size), jnp.float32)
    check(x)
    # 2) streamed-weights fallback path (forced, exercises the 2-D grid).
    check(x, weights_resident=False)
    # 3) ragged M (exercises balanced row tiling / padding).
    x_ragged = jax.random.normal(kx, (batch, seq - 1, hidden_size), jnp.float32)
    check(x_ragged)

    print("KERNEL_OK")
</pallas_src>

<mosaic_0001>
module attributes {stable_mosaic.version = 11 : i64} {
  func.func @_mlp_resident_kernel(%arg0: i32, %arg1: memref<16x32xf32, #tpu.memory_space<vmem>>, %arg2: memref<32x128xf32, #tpu.memory_space<vmem>>, %arg3: memref<1x128xf32, #tpu.memory_space<vmem>>, %arg4: memref<128x32xf32, #tpu.memory_space<vmem>>, %arg5: memref<1x32xf32, #tpu.memory_space<vmem>>, %arg6: memref<16x32xf32, #tpu.memory_space<vmem>>) attributes {dimension_semantics = [#tpu.dimension_semantics<parallel>], iteration_bounds = array<i64: 1>, scalar_prefetch = 0 : i64, scratch_operands = 0 : i64, tpu.core_type = #tpu.core_type<tc>, window_params = [{transform_indices = @transform_0, window_bounds = array<i64: 16, 32>}, {pipeline_mode = #tpu.pipeline_mode<synchronous>, transform_indices = @transform_1, window_bounds = array<i64: 32, 128>}, {pipeline_mode = #tpu.pipeline_mode<synchronous>, transform_indices = @transform_2, window_bounds = array<i64: 1, 128>}, {pipeline_mode = #tpu.pipeline_mode<synchronous>, transform_indices = @transform_3, window_bounds = array<i64: 128, 32>}, {pipeline_mode = #tpu.pipeline_mode<synchronous>, transform_indices = @transform_4, window_bounds = array<i64: 1, 32>}, {transform_indices = @transform_5, window_bounds = array<i64: 16, 32>}]} {
    %c0 = arith.constant 0 : index
    %c0_0 = arith.constant 0 : index
    %0 = vector.load %arg1[%c0, %c0_0] : memref<16x32xf32, #tpu.memory_space<vmem>>, vector<16x32xf32>
    %cst = arith.constant 0.000000e+00 : f32
    %1 = vector.broadcast %cst : f32 to vector<16x32xf32>
    %c0_1 = arith.constant 0 : index
    %c0_2 = arith.constant 0 : index
    %2 = vector.load %arg2[%c0_1, %c0_2] : memref<32x128xf32, #tpu.memory_space<vmem>>, vector<32x128xf32>
    %c0_3 = arith.constant 0 : index
    %c0_4 = arith.constant 0 : index
    %3 = vector.load %arg3[%c0_3, %c0_4] : memref<1x128xf32, #tpu.memory_space<vmem>>, vector<1x128xf32>
    %cst_5 = arith.constant dense<0.000000e+00> : vector<16x128xf32>
    %4 = tpu.matmul %0, %2, %cst_5 {dimension_numbers = #tpu.dot_dimension_numbers<[1], [0], [0], [1], [0, 0, 1, 1], [], []>, precision = #tpu.contract_precision<fp32>} : vector<16x32xf32>, vector<32x128xf32>, vector<16x128xf32> -> vector<16x128xf32>
    %5 = vector.broadcast %3 : vector<1x128xf32> to vector<16x128xf32>
    %6 = arith.addf %4, %5 : vector<16x128xf32>
    %cst_6 = arith.constant 4.471500e-02 : f32
    %7 = vector.broadcast %cst_6 : f32 to vector<16x128xf32>
    %8 = arith.mulf %7, %6 : vector<16x128xf32>
    %9 = arith.mulf %8, %6 : vector<16x128xf32>
    %10 = arith.mulf %9, %6 : vector<16x128xf32>
    %11 = arith.addf %6, %10 : vector<16x128xf32>
    %cst_7 = arith.constant 0.797884583 : f32
    %12 = vector.broadcast %cst_7 : f32 to vector<16x128xf32>
    %13 = arith.mulf %12, %11 : vector<16x128xf32>
    %cst_8 = arith.constant 2.000000e+00 : f32
    %14 = vector.broadcast %cst_8 : f32 to vector<16x128xf32>
    %15 = arith.mulf %14, %13 : vector<16x128xf32>
    %16 = arith.negf %15 : vector<16x128xf32>
    %17 = math.exp %16 : vector<16x128xf32>
    %cst_9 = arith.constant 1.000000e+00 : f32
    %18 = vector.broadcast %cst_9 : f32 to vector<16x128xf32>
    %19 = arith.addf %18, %17 : vector<16x128xf32>
    %20 = arith.divf %18, %19 : vector<16x128xf32>
    %21 = arith.mulf %6, %20 : vector<16x128xf32>
    %c0_10 = arith.constant 0 : index
    %c0_11 = arith.constant 0 : index
    %22 = vector.load %arg4[%c0_10, %c0_11] : memref<128x32xf32, #tpu.memory_space<vmem>>, vector<128x32xf32>
    %cst_12 = arith.constant dense<0.000000e+00> : vector<16x32xf32>
    %23 = tpu.matmul %21, %22, %cst_12 {dimension_numbers = #tpu.dot_dimension_numbers<[1], [0], [0], [1], [0, 0, 1, 1], [], []>, precision = #tpu.contract_precision<fp32>} : vector<16x128xf32>, vector<128x32xf32>, vector<16x32xf32> -> vector<16x32xf32>
    %24 = arith.addf %1, %23 : vector<16x32xf32>
    %c0_13 = arith.constant 0 : index
    %c0_14 = arith.constant 0 : index
    %25 = vector.load %arg5[%c0_13, %c0_14] : memref<1x32xf32, #tpu.memory_space<vmem>>, vector<1x32xf32>
    %26 = vector.broadcast %25 : vector<1x32xf32> to vector<16x32xf32>
    %27 = arith.addf %24, %26 : vector<16x32xf32>
    %c0_15 = arith.constant 0 : index
    %c0_16 = arith.constant 0 : index
    %28 = vector.load %arg6[%c0_15, %c0_16] : memref<16x32xf32, #tpu.memory_space<vmem>>, vector<16x32xf32>
    tpu.vector_store %arg6[%c0_15, %c0_16], %27 {strides = array<i32>} : memref<16x32xf32, #tpu.memory_space<vmem>>, vector<16x32xf32>,
    return
  }
  func.func @transform_0(%arg0: i32) -> (i32, i32) {
    %c0_i32 = arith.constant 0 : i32
    %c0_i32_0 = arith.constant 0 : i32
    return %arg0, %c0_i32 : i32, i32
  }
  func.func @transform_1(%arg0: i32) -> (i32, i32) {
    %c0_i32 = arith.constant 0 : i32
    %c0_i32_0 = arith.constant 0 : i32
    %c0_i32_1 = arith.constant 0 : i32
    return %c0_i32, %c0_i32_0 : i32, i32
  }
  func.func @transform_2(%arg0: i32) -> (i32, i32) {
    %c0_i32 = arith.constant 0 : i32
    %c0_i32_0 = arith.constant 0 : i32
    %c0_i32_1 = arith.constant 0 : i32
    return %c0_i32, %c0_i32_0 : i32, i32
  }
  func.func @transform_3(%arg0: i32) -> (i32, i32) {
    %c0_i32 = arith.constant 0 : i32
    %c0_i32_0 = arith.constant 0 : i32
    %c0_i32_1 = arith.constant 0 : i32
    return %c0_i32, %c0_i32_0 : i32, i32
  }
  func.func @transform_4(%arg0: i32) -> (i32, i32) {
    %c0_i32 = arith.constant 0 : i32
    %c0_i32_0 = arith.constant 0 : i32
    %c0_i32_1 = arith.constant 0 : i32
    return %c0_i32, %c0_i32_0 : i32, i32
  }
  func.func @transform_5(%arg0: i32) -> (i32, i32) {
    %c0_i32 = arith.constant 0 : i32
    %c0_i32_0 = arith.constant 0 : i32
    return %arg0, %c0_i32 : i32, i32
  }
}

</mosaic_0001>

<llo_original>
// kernel: tpu_custom_call.1
$region0: #{tpu_custom_call.1}
  #allocation0 [shape = 'u32[]', space=smem, size = 0x4, offset = 0x4, fixed_abs, tag = 'smem constant byte address 0x4 - core index']
  #allocation1 [shape = 'u32[144,128]{1,0:T(1,128)}', space=vmem, size = 0x12000, scoped, tag = 'internal scratch']
  %s0 = inlined_call_operand.vmem [shape: f32[16,32], index: 0, kind: input, shape index: {}]
  %s1 = inlined_call_operand.vmem [shape: f32[32,128], index: 1, kind: input, shape index: {}]
  %s2 = inlined_call_operand.vmem [shape: f32[1,128], index: 2, kind: input, shape index: {}]
  %s3 = inlined_call_operand.vmem [shape: f32[128,32], index: 3, kind: input, shape index: {}]
  %s4 = inlined_call_operand.vmem [shape: f32[1,32], index: 4, kind: input, shape index: {}]
  %s5 = inlined_call_operand.hbm [shape: f32[16,32], index: 5, kind: output, shape index: {}]
  %s6 = sld [smem:[#allocation0]]
  $region30: #{tpu_custom_call.1} parent=0
    _
  %s8 = ssub.s32 1, %s6
  %s9 = scalar_select 0, %s8, %s6
  $region1: #{tpu_custom_call.1} parent=0
    #allocation2 [shape = 'u8[8192]{0}', space=vmem, size = 0x2000, scoped, tag = 'output window, operand 0, single buffered']
    #allocation3 [shape = 's32[1]{0}', space=sflag, size = 0x4, scoped, tag = 'scoped memory for tpu_custom_call.1']
    %10 = vsyncpa [#allocation3], 0
    // Predicated region
    $region2: #{tpu_custom_call.1} parent=1 // pred_check
      _
    $region3: #{tpu_custom_call.1} parent=1 // pred_check_branch
      %12 = sbr.rel (0) target = $region5
    $region4: #{tpu_custom_call.1} parent=1 // pred_region
      _
    $region5: #{tpu_custom_call.1} parent=1 // pred_fallthru
      _
    // Predicated region
    $region6: #{tpu_custom_call.1} parent=1 // pred_check
      _
    $region7: #{tpu_custom_call.1} parent=1 // pred_check_branch
      %14 = sbr.rel (0) target = $region9
    $region8: #{tpu_custom_call.1} parent=1 // pred_region
      _
    $region9: #{tpu_custom_call.1} parent=1 // pred_fallthru
      _
    // Predicated region
    $region10: #{tpu_custom_call.1} parent=1 // pred_check
      _
    $region11: #{tpu_custom_call.1} parent=1 // pred_check_branch
      %16 = sbr.rel (0) target = $region13
    $region12: #{tpu_custom_call.1} parent=1 // pred_region
      _
    $region13: #{tpu_custom_call.1} parent=1 // pred_fallthru
      _
    // Predicated region
    $region14: #{tpu_custom_call.1} parent=1 // pred_check
      _
    $region15: #{tpu_custom_call.1} parent=1 // pred_check_branch
      %18 = sbr.rel (0) target = $region17
    $region16: #{tpu_custom_call.1} parent=1 // pred_region
      _
    $region17: #{tpu_custom_call.1} parent=1 // pred_fallthru
      _
    // Predicated region
    $region18: #{tpu_custom_call.1} parent=1 // pred_check
      _
    $region19: #{tpu_custom_call.1} parent=1 // pred_check_branch
      %20 = sbr.rel (0) target = $region21
    $region20: #{tpu_custom_call.1} parent=1 // pred_region
      _
    $region21: #{tpu_custom_call.1} parent=1 // pred_fallthru
      _
    %v21 = vld [vmem:[%s0] sm:$0xff]
    %v22 = vld [vmem:[%s0 + $0x8] sm:$0xff]
    %v23 = vld [vmem:[%s1] sm:$0xff]
    %v24 = vld [vmem:[%s1 + $0x8] sm:$0xff]
    %v25 = vld [vmem:[%s1 + $0x10] sm:$0xff]
    %v26 = vld [vmem:[%s1 + $0x18] sm:$0xff]
    %v27 = vld [vmem:[%s2] sm:$0x1]
    %v29 = vlaneseq
    %v30 = vshrl.u32 %v29, 7
    %v31 = vsub.s32 0, %v30
    %v32 = vrot.slane %v27, %v31
    %vm34 = vcmask 261120
    %v36 = vsel %vm34, %v21, 0
    %v39 = vsel %vm34, %v22, 0
    %41 = vmatprep.subr.mxu0 0.0
    %v42 = vand.u32 %v23, 4294901760
    %43 = vmatpush1.msra.mxu0 %v42
    %44 = vmatprep.subr.mxu0 0.0
    %v45 = vand.u32 %v24, 4294901760
    %46 = vmatpush1.msra.mxu0 %v45
    %47 = vmatprep.subr.mxu0 0.0
    %v48 = vand.u32 %v25, 4294901760
    %49 = vmatpush1.msra.mxu0 %v48
    %50 = vmatprep.subr.mxu0 0.0
    %v51 = vand.u32 %v26, 4294901760
    %52 = vmatpush1.msra.mxu0 %v51
    %53 = vmatprep.subr.mxu0 0.0
    %54 = vmatpush1.msra.mxu0 0.0
    %55 = vmatprep.subr.mxu0 0.0
    %56 = vmatpush1.msra.mxu0 0.0
    %57 = vmatprep.subr.mxu0 0.0
    %58 = vmatpush1.msra.mxu0 0.0
    %59 = vmatprep.subr.mxu0 0.0
    %60 = vmatpush1.msra.mxu0 0.0
    %61 = vmatprep.subr.mxu0 0.0
    %62 = vmatpush1.msra.mxu0 0.0
    %63 = vmatprep.subr.mxu0 0.0
    %64 = vmatpush1.msra.mxu0 0.0
    %65 = vmatprep.subr.mxu0 0.0
    %66 = vmatpush1.msra.mxu0 0.0
    %67 = vmatprep.subr.mxu0 0.0
    %68 = vmatpush1.msra.mxu0 0.0
    %69 = vmatprep.subr.mxu0 0.0
    %70 = vmatpush1.msra.mxu0 0.0
    %71 = vmatprep.subr.mxu0 0.0
    %72 = vmatpush1.msra.mxu0 0.0
    %73 = vmatprep.subr.mxu0 0.0
    %74 = vmatpush1.msra.mxu0 0.0
    %75 = vmatprep.subr.mxu0 0.0
    %76 = vmatpush1.msra.mxu0 0.0
    %77 = vmatprep.subr.mxu0 0.0
    %78 = vmatpush1.msra.mxu0 0.0
    %79 = vmatprep.subr.mxu0 0.0
    %80 = vmatpush1.msra.mxu0 0.0
    %81 = vmatprep.subr.mxu0 0.0
    %82 = vmatpush1.msra.mxu0 0.0
    %83 = vmatprep.subr.mxu0 0.0
    %84 = vmatpush1.msra.mxu0 0.0
    %85 = vmatprep.subr.mxu0 0.0
    %86 = vmatpush1.msra.mxu0 0.0
    %87 = vmatprep.subr.mxu0 0.0
    %88 = vmatpush1.msra.mxu0 0.0
    %89 = vmatprep.subr.mxu0 0.0
    %90 = vmatpush1.msra.mxu0 0.0
    %91 = vmatprep.subr.mxu0 0.0
    %92 = vmatpush1.msra.mxu0 0.0
    %93 = vmatprep.subr.mxu0 0.0
    %94 = vmatpush1.msra.mxu0 0.0
    %95 = vmatprep.subr.mxu0 0.0
    %96 = vmatpush1.msra.mxu0 0.0
    %97 = vmatprep.subr.mxu0 0.0
    %98 = vmatpush1.msra.mxu0 0.0
    %99 = vmatprep.subr.mxu0 0.0
    %100 = vmatpush1.msra.mxu0 0.0
    %101 = vmatprep.subr.mxu0 0.0
    %102 = vmatpush1.msra.mxu0 0.0
    %103 = vmatprep.subr.mxu0 0.0
    %104 = vmatpush1.msra.mxu0 0.0
    %105 = vmatprep.subr.mxu0 0.0
    %106 = vmatpush1.msra.mxu0 0.0
    %107 = vmatprep.subr.mxu0 0.0
    %108 = vmatpush1.msra.mxu0 0.0
    %109 = vmatprep.mubr.f32.mxu0 0.0
    %v110 = vand.u32 %v36, 4294901760
    %v111 = vsub.f32 %v36, %v110
    %v112 = vand.u32 %v111, 4294901760
    %v113 = vsub.f32 %v111, %v112
    %v114 = vand.u32 %v113, 4294901760
    %115 = vmatmul.mubr.f32.gmra.mrb[0].mxu0 %v114
    %v116 = vpop.f32.mrb[0].mxu0
    %v117 = vadd.f32 %v32, %v116
    %v118 = vpop.f32.mrb[0].mxu0
    %119 = vmatprep.mubr.f32.mxu0 0.0
    %v120 = vand.u32 %v39, 4294901760
    %v121 = vsub.f32 %v39, %v120
    %v122 = vand.u32 %v121, 4294901760
    %v123 = vsub.f32 %v121, %v122
    %v124 = vand.u32 %v123, 4294901760
    %125 = vmatmul.mubr.f32.gmra.mrb[0].mxu0 %v124
    %v126 = vpop.f32.mrb[0].mxu0
    %v127 = vadd.f32 %v32, %v126
    %v128 = vpop.f32.mrb[0].mxu0
    %129 = vdwg.mxu0
    %130 = vmatprep.subr.mxu0 0.0
    %v131 = vand.u32 %v23, 4294901760
    %v132 = vsub.f32 %v23, %v131
    %v133 = vand.u32 %v132, 4294901760
    %v134 = vsub.f32 %v132, %v133
    %v135 = vand.u32 %v134, 4294901760
    %136 = vmatpush1.msra.mxu0 %v135
    %137 = vmatprep.subr.mxu0 0.0
    %v138 = vand.u32 %v24, 4294901760
    %v139 = vsub.f32 %v24, %v138
    %v140 = vand.u32 %v139, 4294901760
    %v141 = vsub.f32 %v139, %v140
    %v142 = vand.u32 %v141, 4294901760
    %143 = vmatpush1.msra.mxu0 %v142
    %144 = vmatprep.subr.mxu0 0.0
    %v145 = vand.u32 %v25, 4294901760
    %v146 = vsub.f32 %v25, %v145
    %v147 = vand.u32 %v146, 4294901760
    %v148 = vsub.f32 %v146, %v147
    %v149 = vand.u32 %v148, 4294901760
    %150 = vmatpush1.msra.mxu0 %v149
    %151 = vmatprep.subr.mxu0 0.0
    %v152 = vand.u32 %v26, 4294901760
    %v153 = vsub.f32 %v26, %v152
    %v154 = vand.u32 %v153, 4294901760
    %v155 = vsub.f32 %v153, %v154
    %v156 = vand.u32 %v155, 4294901760
    %157 = vmatpush1.msra.mxu0 %v156
    %158 = vmatprep.subr.mxu0 0.0
    %159 = vmatpush1.msra.mxu0 0.0
    %160 = vmatprep.subr.mxu0 0.0
    %161 = vmatpush1.msra.mxu0 0.0
    %162 = vmatprep.subr.mxu0 0.0
    %163 = vmatpush1.msra.mxu0 0.0
    %164 = vmatprep.subr.mxu0 0.0
    %165 = vmatpush1.msra.mxu0 0.0
    %166 = vmatprep.subr.mxu0 0.0
    %167 = vmatpush1.msra.mxu0 0.0
    %168 = vmatprep.subr.mxu0 0.0
    %169 = vmatpush1.msra.mxu0 0.0
    %170 = vmatprep.subr.mxu0 0.0
    %171 = vmatpush1.msra.mxu0 0.0
    %172 = vmatprep.subr.mxu0 0.0
    %173 = vmatpush1.msra.mxu0 0.0
    %174 = vmatprep.subr.mxu0 0.0
    %175 = vmatpush1.msra.mxu0 0.0
    %176 = vmatprep.subr.mxu0 0.0
    %177 = vmatpush1.msra.mxu0 0.0
    %178 = vmatprep.subr.mxu0 0.0
    %179 = vmatpush1.msra.mxu0 0.0
    %180 = vmatprep.subr.mxu0 0.0
    %181 = vmatpush1.msra.mxu0 0.0
    %182 = vmatprep.subr.mxu0 0.0
    %183 = vmatpush1.msra.mxu0 0.0
    %184 = vmatprep.subr.mxu0 0.0
    %185 = vmatpush1.msra.mxu0 0.0
    %186 = vmatprep.subr.mxu0 0.0
    %187 = vmatpush1.msra.mxu0 0.0
    %188 = vmatprep.subr.mxu0 0.0
    %189 = vmatpush1.msra.mxu0 0.0
    %190 = vmatprep.subr.mxu0 0.0
    %191 = vmatpush1.msra.mxu0 0.0
    %192 = vmatprep.subr.mxu0 0.0
    %193 = vmatpush1.msra.mxu0 0.0
    %194 = vmatprep.subr.mxu0 0.0
    %195 = vmatpush1.msra.mxu0 0.0
    %196 = vmatprep.subr.mxu0 0.0
    %197 = vmatpush1.msra.mxu0 0.0
    %198 = vmatprep.subr.mxu0 0.0
    %199 = vmatpush1.msra.mxu0 0.0
    %200 = vmatprep.subr.mxu0 0.0
    %201 = vmatpush1.msra.mxu0 0.0
    %202 = vmatprep.subr.mxu0 0.0
    %203 = vmatpush1.msra.mxu0 0.0
    %204 = vmatprep.subr.mxu0 0.0
    %205 = vmatpush1.msra.mxu0 0.0
    %206 = vmatprep.subr.mxu0 0.0
    %207 = vmatpush1.msra.mxu0 0.0
    %208 = vmatprep.subr.mxu0 0.0
    %209 = vmatpush1.msra.mxu0 0.0
    %210 = vmatprep.subr.mxu0 0.0
    %211 = vmatpush1.msra.mxu0 0.0
    %212 = vmatprep.subr.mxu0 0.0
    %213 = vmatpush1.msra.mxu0 0.0
    %214 = vmatprep.mubr.f32.mxu0 0.0
    %v215 = vand.u32 %v36, 4294901760
    %216 = vmatmul.mubr.f32.gmra.mrb[0].mxu0 %v215
    %v217 = vpop.f32.mrb[0].mxu0
    %v218 = vadd.f32 %v117, %v217
    %v219 = vpop.f32.mrb[0].mxu0
    %220 = vmatprep.mubr.f32.mxu0 0.0
    %v221 = vand.u32 %v39, 4294901760
    %222 = vmatmul.mubr.f32.gmra.mrb[0].mxu0 %v221
    %v223 = vpop.f32.mrb[0].mxu0
    %v224 = vadd.f32 %v127, %v223
    %v225 = vpop.f32.mrb[0].mxu0
    %226 = vdwg.mxu0
    %227 = vmatprep.subr.mxu0 0.0
    %v228 = vand.u32 %v23, 4294901760
    %v229 = vsub.f32 %v23, %v228
    %230 = vmatpush1.msra.mxu0 %v229
    %231 = vmatprep.subr.mxu0 0.0
    %v232 = vand.u32 %v24, 4294901760
    %v233 = vsub.f32 %v24, %v232
    %234 = vmatpush1.msra.mxu0 %v233
    %235 = vmatprep.subr.mxu0 0.0
    %v236 = vand.u32 %v25, 4294901760
    %v237 = vsub.f32 %v25, %v236
    %238 = vmatpush1.msra.mxu0 %v237
    %239 = vmatprep.subr.mxu0 0.0
    %v240 = vand.u32 %v26, 4294901760
    %v241 = vsub.f32 %v26, %v240
    %242 = vmatpush1.msra.mxu0 %v241
    %243 = vmatprep.subr.mxu0 0.0
    %244 = vmatpush1.msra.mxu0 0.0
    %245 = vmatprep.subr.mxu0 0.0
    %246 = vmatpush1.msra.mxu0 0.0
    %247 = vmatprep.subr.mxu0 0.0
    %248 = vmatpush1.msra.mxu0 0.0
    %249 = vmatprep.subr.mxu0 0.0
    %250 = vmatpush1.msra.mxu0 0.0
    %251 = vmatprep.subr.mxu0 0.0
    %252 = vmatpush1.msra.mxu0 0.0
    %253 = vmatprep.subr.mxu0 0.0
    %254 = vmatpush1.msra.mxu0 0.0
    %255 = vmatprep.subr.mxu0 0.0
    %256 = vmatpush1.msra.mxu0 0.0
    %257 = vmatprep.subr.mxu0 0.0
    %258 = vmatpush1.msra.mxu0 0.0
    %259 = vmatprep.subr.mxu0 0.0
    %260 = vmatpush1.msra.mxu0 0.0
    %261 = vmatprep.subr.mxu0 0.0
    %262 = vmatpush1.msra.mxu0 0.0
    %263 = vmatprep.subr.mxu0 0.0
    %264 = vmatpush1.msra.mxu0 0.0
    %265 = vmatprep.subr.mxu0 0.0
    %266 = vmatpush1.msra.mxu0 0.0
    %267 = vmatprep.subr.mxu0 0.0
    %268 = vmatpush1.msra.mxu0 0.0
    %269 = vmatprep.subr.mxu0 0.0
    %270 = vmatpush1.msra.mxu0 0.0
    %271 = vmatprep.subr.mxu0 0.0
    %272 = vmatpush1.msra.mxu0 0.0
    %273 = vmatprep.subr.mxu0 0.0
    %274 = vmatpush1.msra.mxu0 0.0
    %275 = vmatprep.subr.mxu0 0.0
    %276 = vmatpush1.msra.mxu0 0.0
    %277 = vmatprep.subr.mxu0 0.0
    %278 = vmatpush1.msra.mxu0 0.0
    %279 = vmatprep.subr.mxu0 0.0
    %280 = vmatpush1.msra.mxu0 0.0
    %281 = vmatprep.subr.mxu0 0.0
    %282 = vmatpush1.msra.mxu0 0.0
    %283 = vmatprep.subr.mxu0 0.0
    %284 = vmatpush1.msra.mxu0 0.0
    %285 = vmatprep.subr.mxu0 0.0
    %286 = vmatpush1.msra.mxu0 0.0
    %287 = vmatprep.subr.mxu0 0.0
    %288 = vmatpush1.msra.mxu0 0.0
    %289 = vmatprep.subr.mxu0 0.0
    %290 = vmatpush1.msra.mxu0 0.0
    %291 = vmatprep.subr.mxu0 0.0
    %292 = vmatpush1.msra.mxu0 0.0
    %293 = vmatprep.subr.mxu0 0.0
    %294 = vmatpush1.msra.mxu0 0.0
    %295 = vmatprep.subr.mxu0 0.0
    %296 = vmatpush1.msra.mxu0 0.0
    %297 = vmatprep.subr.mxu0 0.0
    %298 = vmatpush1.msra.mxu0 0.0
    %299 = vmatprep.mubr.f32.mxu0 0.0
    %v300 = vand.u32 %v36, 4294901760
    %v301 = vsub.f32 %v36, %v300
    %302 = vmatmul.mubr.f32.gmra.mrb[0].mxu0 %v301
    %v303 = vpop.f32.mrb[0].mxu0
    %v304 = vadd.f32 %v218, %v303
    %v305 = vpop.f32.mrb[0].mxu0
    %306 = vmatprep.mubr.f32.mxu0 0.0
    %v307 = vand.u32 %v39, 4294901760
    %v308 = vsub.f32 %v39, %v307
    %309 = vmatmul.mubr.f32.gmra.mrb[0].mxu0 %v308
    %v310 = vpop.f32.mrb[0].mxu0
    %v311 = vadd.f32 %v224, %v310
    %v312 = vpop.f32.mrb[0].mxu0
    %313 = vdwg.mxu0
    %314 = vmatprep.subr.mxu0 0.0
    %v315 = vand.u32 %v23, 4294901760
    %316 = vmatpush1.msra.mxu0 %v315
    %317 = vmatprep.subr.mxu0 0.0
    %v318 = vand.u32 %v24, 4294901760
    %319 = vmatpush1.msra.mxu0 %v318
    %320 = vmatprep.subr.mxu0 0.0
    %v321 = vand.u32 %v25, 4294901760
    %322 = vmatpush1.msra.mxu0 %v321
    %323 = vmatprep.subr.mxu0 0.0
    %v324 = vand.u32 %v26, 4294901760
    %325 = vmatpush1.msra.mxu0 %v324
    %326 = vmatprep.subr.mxu0 0.0
    %327 = vmatpush1.msra.mxu0 0.0
    %328 = vmatprep.subr.mxu0 0.0
    %329 = vmatpush1.msra.mxu0 0.0
    %330 = vmatprep.subr.mxu0 0.0
    %331 = vmatpush1.msra.mxu0 0.0
    %332 = vmatprep.subr.mxu0 0.0
    %333 = vmatpush1.msra.mxu0 0.0
    %334 = vmatprep.subr.mxu0 0.0
    %335 = vmatpush1.msra.mxu0 0.0
    %336 = vmatprep.subr.mxu0 0.0
    %337 = vmatpush1.msra.mxu0 0.0
    %338 = vmatprep.subr.mxu0 0.0
    %339 = vmatpush1.msra.mxu0 0.0
    %340 = vmatprep.subr.mxu0 0.0
    %341 = vmatpush1.msra.mxu0 0.0
    %342 = vmatprep.subr.mxu0 0.0
    %343 = vmatpush1.msra.mxu0 0.0
    %344 = vmatprep.subr.mxu0 0.0
    %345 = vmatpush1.msra.mxu0 0.0
    %346 = vmatprep.subr.mxu0 0.0
    %347 = vmatpush1.msra.mxu0 0.0
    %348 = vmatprep.subr.mxu0 0.0
    %349 = vmatpush1.msra.mxu0 0.0
    %350 = vmatprep.subr.mxu0 0.0
    %351 = vmatpush1.msra.mxu0 0.0
    %352 = vmatprep.subr.mxu0 0.0
    %353 = vmatpush1.msra.mxu0 0.0
    %354 = vmatprep.subr.mxu0 0.0
    %355 = vmatpush1.msra.mxu0 0.0
    %356 = vmatprep.subr.mxu0 0.0
    %357 = vmatpush1.msra.mxu0 0.0
    %358 = vmatprep.subr.mxu0 0.0
    %359 = vmatpush1.msra.mxu0 0.0
    %360 = vmatprep.subr.mxu0 0.0
    %361 = vmatpush1.msra.mxu0 0.0
    %362 = vmatprep.subr.mxu0 0.0
    %363 = vmatpush1.msra.mxu0 0.0
    %364 = vmatprep.subr.mxu0 0.0
    %365 = vmatpush1.msra.mxu0 0.0
    %366 = vmatprep.subr.mxu0 0.0
    %367 = vmatpush1.msra.mxu0 0.0
    %368 = vmatprep.subr.mxu0 0.0
    %369 = vmatpush1.msra.mxu0 0.0
    %370 = vmatprep.subr.mxu0 0.0
    %371 = vmatpush1.msra.mxu0 0.0
    %372 = vmatprep.subr.mxu0 0.0
    %373 = vmatpush1.msra.mxu0 0.0
    %374 = vmatprep.subr.mxu0 0.0
    %375 = vmatpush1.msra.mxu0 0.0
    %376 = vmatprep.subr.mxu0 0.0
    %377 = vmatpush1.msra.mxu0 0.0
    %378 = vmatprep.subr.mxu0 0.0
    %379 = vmatpush1.msra.mxu0 0.0
    %380 = vmatprep.subr.mxu0 0.0
    %381 = vmatpush1.msra.mxu0 0.0
    %382 = vmatprep.mubr.f32.mxu0 0.0
    %v383 = vand.u32 %v36, 4294901760
    %v384 = vsub.f32 %v36, %v383
    %v385 = vand.u32 %v384, 4294901760
    %386 = vmatmul.mubr.f32.gmra.mrb[0].mxu0 %v385
    %v387 = vpop.f32.mrb[0].mxu0
    %v388 = vadd.f32 %v304, %v387
    %v389 = vpop.f32.mrb[0].mxu0
    %390 = vmatprep.mubr.f32.mxu0 0.0
    %v391 = vand.u32 %v39, 4294901760
    %v392 = vsub.f32 %v39, %v391
    %v393 = vand.u32 %v392, 4294901760
    %394 = vmatmul.mubr.f32.gmra.mrb[0].mxu0 %v393
    %v395 = vpop.f32.mrb[0].mxu0
    %v396 = vadd.f32 %v311, %v395
    %v397 = vpop.f32.mrb[0].mxu0
    %398 = vdwg.mxu0
    %399 = vmatprep.subr.mxu0 0.0
    %v400 = vand.u32 %v23, 4294901760
    %v401 = vsub.f32 %v23, %v400
    %v402 = vand.u32 %v401, 4294901760
    %403 = vmatpush1.msra.mxu0 %v402
    %404 = vmatprep.subr.mxu0 0.0
    %v405 = vand.u32 %v24, 4294901760
    %v406 = vsub.f32 %v24, %v405
    %v407 = vand.u32 %v406, 4294901760
    %408 = vmatpush1.msra.mxu0 %v407
    %409 = vmatprep.subr.mxu0 0.0
    %v410 = vand.u32 %v25, 4294901760
    %v411 = vsub.f32 %v25, %v410
    %v412 = vand.u32 %v411, 4294901760
    %413 = vmatpush1.msra.mxu0 %v412
    %414 = vmatprep.subr.mxu0 0.0
    %v415 = vand.u32 %v26, 4294901760
    %v416 = vsub.f32 %v26, %v415
    %v417 = vand.u32 %v416, 4294901760
    %418 = vmatpush1.msra.mxu0 %v417
    %419 = vmatprep.subr.mxu0 0.0
    %420 = vmatpush1.msra.mxu0 0.0
    %421 = vmatprep.subr.mxu0 0.0
    %422 = vmatpush1.msra.mxu0 0.0
    %423 = vmatprep.subr.mxu0 0.0
    %424 = vmatpush1.msra.mxu0 0.0
    %425 = vmatprep.subr.mxu0 0.0
    %426 = vmatpush1.msra.mxu0 0.0
    %427 = vmatprep.subr.mxu0 0.0
    %428 = vmatpush1.msra.mxu0 0.0
    %429 = vmatprep.subr.mxu0 0.0
    %430 = vmatpush1.msra.mxu0 0.0
    %431 = vmatprep.subr.mxu0 0.0
    %432 = vmatpush1.msra.mxu0 0.0
    %433 = vmatprep.subr.mxu0 0.0
    %434 = vmatpush1.msra.mxu0 0.0
    %435 = vmatprep.subr.mxu0 0.0
    %436 = vmatpush1.msra.mxu0 0.0
    %437 = vmatprep.subr.mxu0 0.0
    %438 = vmatpush1.msra.mxu0 0.0
    %439 = vmatprep.subr.mxu0 0.0
    %440 = vmatpush1.msra.mxu0 0.0
    %441 = vmatprep.subr.mxu0 0.0
    %442 = vmatpush1.msra.mxu0 0.0
    %443 = vmatprep.subr.mxu0 0.0
    %444 = vmatpush1.msra.mxu0 0.0
    %445 = vmatprep.subr.mxu0 0.0
    %446 = vmatpush1.msra.mxu0 0.0
    %447 = vmatprep.subr.mxu0 0.0
    %448 = vmatpush1.msra.mxu0 0.0
    %449 = vmatprep.subr.mxu0 0.0
    %450 = vmatpush1.msra.mxu0 0.0
    %451 = vmatprep.subr.mxu0 0.0
    %452 = vmatpush1.msra.mxu0 0.0
    %453 = vmatprep.subr.mxu0 0.0
    %454 = vmatpush1.msra.mxu0 0.0
    %455 = vmatprep.subr.mxu0 0.0
    %456 = vmatpush1.msra.mxu0 0.0
    %457 = vmatprep.subr.mxu0 0.0
    %458 = vmatpush1.msra.mxu0 0.0
    %459 = vmatprep.subr.mxu0 0.0
    %460 = vmatpush1.msra.mxu0 0.0
    %461 = vmatprep.subr.mxu0 0.0
    %462 = vmatpush1.msra.mxu0 0.0
    %463 = vmatprep.subr.mxu0 0.0
    %464 = vmatpush1.msra.mxu0 0.0
    %465 = vmatprep.subr.mxu0 0.0
    %466 = vmatpush1.msra.mxu0 0.0
    %467 = vmatprep.subr.mxu0 0.0
    %468 = vmatpush1.msra.mxu0 0.0
    %469 = vmatprep.subr.mxu0 0.0
    %470 = vmatpush1.msra.mxu0 0.0
    %471 = vmatprep.subr.mxu0 0.0
    %472 = vmatpush1.msra.mxu0 0.0
    %473 = vmatprep.subr.mxu0 0.0
    %474 = vmatpush1.msra.mxu0 0.0
    %475 = vmatprep.mubr.f32.mxu0 0.0
    %v476 = vand.u32 %v36, 4294901760
    %477 = vmatmul.mubr.f32.gmra.mrb[0].mxu0 %v476
    %v478 = vpop.f32.mrb[0].mxu0
    %v479 = vadd.f32 %v388, %v478
    %v480 = vpop.f32.mrb[0].mxu0
    %481 = vmatprep.mubr.f32.mxu0 0.0
    %v482 = vand.u32 %v39, 4294901760
    %483 = vmatmul.mubr.f32.gmra.mrb[0].mxu0 %v482
    %v484 = vpop.f32.mrb[0].mxu0
    %v485 = vadd.f32 %v396, %v484
    %v486 = vpop.f32.mrb[0].mxu0
    %487 = vdwg.mxu0
    %488 = vmatprep.subr.mxu0 0.0
    %v489 = vand.u32 %v23, 4294901760
    %490 = vmatpush1.msra.mxu0 %v489
    %491 = vmatprep.subr.mxu0 0.0
    %v492 = vand.u32 %v24, 4294901760
    %493 = vmatpush1.msra.mxu0 %v492
    %494 = vmatprep.subr.mxu0 0.0
    %v495 = vand.u32 %v25, 4294901760
    %496 = vmatpush1.msra.mxu0 %v495
    %497 = vmatprep.subr.mxu0 0.0
    %v498 = vand.u32 %v26, 4294901760
    %499 = vmatpush1.msra.mxu0 %v498
    %500 = vmatprep.subr.mxu0 0.0
    %501 = vmatpush1.msra.mxu0 0.0
    %502 = vmatprep.subr.mxu0 0.0
    %503 = vmatpush1.msra.mxu0 0.0
    %504 = vmatprep.subr.mxu0 0.0
    %505 = vmatpush1.msra.mxu0 0.0
    %506 = vmatprep.subr.mxu0 0.0
    %507 = vmatpush1.msra.mxu0 0.0
    %508 = vmatprep.subr.mxu0 0.0
    %509 = vmatpush1.msra.mxu0 0.0
    %510 = vmatprep.subr.mxu0 0.0
    %511 = vmatpush1.msra.mxu0 0.0
    %512 = vmatprep.subr.mxu0 0.0
    %513 = vmatpush1.msra.mxu0 0.0
    %514 = vmatprep.subr.mxu0 0.0
    %515 = vmatpush1.msra.mxu0 0.0
    %516 = vmatprep.subr.mxu0 0.0
    %517 = vmatpush1.msra.mxu0 0.0
    %518 = vmatprep.subr.mxu0 0.0
    %519 = vmatpush1.msra.mxu0 0.0
    %520 = vmatprep.subr.mxu0 0.0
    %521 = vmatpush1.msra.mxu0 0.0
    %522 = vmatprep.subr.mxu0 0.0
    %523 = vmatpush1.msra.mxu0 0.0
    %524 = vmatprep.subr.mxu0 0.0
    %525 = vmatpush1.msra.mxu0 0.0
    %526 = vmatprep.subr.mxu0 0.0
    %527 = vmatpush1.msra.mxu0 0.0
    %528 = vmatprep.subr.mxu0 0.0
    %529 = vmatpush1.msra.mxu0 0.0
    %530 = vmatprep.subr.mxu0 0.0
    %531 = vmatpush1.msra.mxu0 0.0
    %532 = vmatprep.subr.mxu0 0.0
    %533 = vmatpush1.msra.mxu0 0.0
    %534 = vmatprep.subr.mxu0 0.0
    %535 = vmatpush1.msra.mxu0 0.0
    %536 = vmatprep.subr.mxu0 0.0
    %537 = vmatpush1.msra.mxu0 0.0
    %538 = vmatprep.subr.mxu0 0.0
    %539 = vmatpush1.msra.mxu0 0.0
    %540 = vmatprep.subr.mxu0 0.0
    %541 = vmatpush1.msra.mxu0 0.0
    %542 = vmatprep.subr.mxu0 0.0
    %543 = vmatpush1.msra.mxu0 0.0
    %544 = vmatprep.subr.mxu0 0.0
    %545 = vmatpush1.msra.mxu0 0.0
    %546 = vmatprep.subr.mxu0 0.0
    %547 = vmatpush1.msra.mxu0 0.0
    %548 = vmatprep.subr.mxu0 0.0
    %549 = vmatpush1.msra.mxu0 0.0
    %550 = vmatprep.subr.mxu0 0.0
    %551 = vmatpush1.msra.mxu0 0.0
    %552 = vmatprep.subr.mxu0 0.0
    %553 = vmatpush1.msra.mxu0 0.0
    %554 = vmatprep.subr.mxu0 0.0
    %555 = vmatpush1.msra.mxu0 0.0
    %556 = vmatprep.mubr.f32.mxu0 0.0
    %v557 = vand.u32 %v36, 4294901760
    %558 = vmatmul.mubr.f32.gmra.mrb[0].mxu0 %v557
    %v559 = vpop.f32.mrb[0].mxu0
    %v560 = vadd.f32 %v479, %v559
    %v561 = vpop.f32.mrb[0].mxu0
    %562 = vmatprep.mubr.f32.mxu0 0.0
    %v563 = vand.u32 %v39, 4294901760
    %564 = vmatmul.mubr.f32.gmra.mrb[0].mxu0 %v563
    %v565 = vpop.f32.mrb[0].mxu0
    %v566 = vadd.f32 %v485, %v565
    %v567 = vpop.f32.mrb[0].mxu0
    %568 = vdwg.mxu0
    %v569 = vmul.f32 %v560, 0.044715
    %v570 = vmul.f32 %v566, 0.044715
    %v571 = vmul.f32 %v569, %v560
    %v572 = vmul.f32 %v570, %v566
    %v573 = vmul.f32 %v571, %v560
    %v574 = vmul.f32 %v572, %v566
    %v575 = vadd.f32 %v560, %v573
    %v576 = vadd.f32 %v566, %v574
    %v577 = vmul.f32 %v575, 0.7978846
    %v578 = vmul.f32 %v576, 0.7978846
    %v579 = vmul.f32 %v577, 2.0
    %v580 = vmul.f32 %v578, 2.0
    %v581 = vxor.u32 %v579, 2147483648
    %v582 = vxor.u32 %v580, 2147483648
    %v583 = vmul.f32 %v581, 1.442695
    %v584 = vpow.pop %v583
    %v585 = vmul.f32 %v582, 1.442695
    %v586 = vpow.pop %v585
    %v587 = vadd.f32 %v584, 1.0
    %v588 = vadd.f32 %v586, 1.0
    %v589 = vrcp.pop %v587
    %v590 = vmul.f32 1.0, %v589
    %v591 = vrcp.pop %v588
    %v592 = vmul.f32 1.0, %v591
    %v593 = vmul.f32 %v560, %v590
    %v594 = vmul.f32 %v566, %v592
    %v595 = vld [vmem:[%s3] sm:$0xff]
    %v596 = vld [vmem:[%s3 + $0x8] sm:$0xff]
    %v597 = vld [vmem:[%s3 + $0x10] sm:$0xff]
    %v598 = vld [vmem:[%s3 + $0x18] sm:$0xff]
    %v599 = vld [vmem:[%s3 + $0x20] sm:$0xff]
    %v600 = vld [vmem:[%s3 + $0x28] sm:$0xff]
    %v601 = vld [vmem:[%s3 + $0x30] sm:$0xff]
    %v602 = vld [vmem:[%s3 + $0x38] sm:$0xff]
    %v603 = vld [vmem:[%s3 + $0x40] sm:$0xff]
    %v604 = vld [vmem:[%s3 + $0x48] sm:$0xff]
    %v605 = vld [vmem:[%s3 + $0x50] sm:$0xff]
    %v606 = vld [vmem:[%s3 + $0x58] sm:$0xff]
    %v607 = vld [vmem:[%s3 + $0x60] sm:$0xff]
    %v608 = vld [vmem:[%s3 + $0x68] sm:$0xff]
    %v609 = vld [vmem:[%s3 + $0x70] sm:$0xff]
    %v610 = vld [vmem:[%s3 + $0x78] sm:$0xff]
    %v611 = vld [vmem:[%s4] sm:$0x1]
    %v613 = vlaneseq
    %v614 = vshrl.u32 %v613, 7
    %v615 = vsub.s32 0, %v614
    %v616 = vrot.slane %v611, %v615
    %618 = vmatprep.subr.mxu0 0.0
    %v619 = vand.u32 %v595, 4294901760
    %620 = vmatpush1.msra.mxu0 %v619
    %621 = vmatprep.subr.mxu0 0.0
    %v622 = vand.u32 %v596, 4294901760
    %623 = vmatpush1.msra.mxu0 %v622
    %624 = vmatprep.subr.mxu0 0.0
    %v625 = vand.u32 %v597, 4294901760
    %626 = vmatpush1.msra.mxu0 %v625
    %627 = vmatprep.subr.mxu0 0.0
    %v628 = vand.u32 %v598, 4294901760
    %629 = vmatpush1.msra.mxu0 %v628
    %630 = vmatprep.subr.mxu0 0.0
    %v631 = vand.u32 %v599, 4294901760
    %632 = vmatpush1.msra.mxu0 %v631
    %633 = vmatprep.subr.mxu0 0.0
    %v634 = vand.u32 %v600, 4294901760
    %635 = vmatpush1.msra.mxu0 %v634
    %636 = vmatprep.subr.mxu0 0.0
    %v637 = vand.u32 %v601, 4294901760
    %638 = vmatpush1.msra.mxu0 %v637
    %639 = vmatprep.subr.mxu0 0.0
    %v640 = vand.u32 %v602, 4294901760
    %641 = vmatpush1.msra.mxu0 %v640
    %642 = vmatprep.subr.mxu0 0.0
    %v643 = vand.u32 %v603, 4294901760
    %644 = vmatpush1.msra.mxu0 %v643
    %645 = vmatprep.subr.mxu0 0.0
    %v646 = vand.u32 %v604, 4294901760
    %647 = vmatpush1.msra.mxu0 %v646
    %648 = vmatprep.subr.mxu0 0.0
    %v649 = vand.u32 %v605, 4294901760
    %650 = vmatpush1.msra.mxu0 %v649
    %651 = vmatprep.subr.mxu0 0.0
    %v652 = vand.u32 %v606, 4294901760
    %653 = vmatpush1.msra.mxu0 %v652
    %654 = vmatprep.subr.mxu0 0.0
    %v655 = vand.u32 %v607, 4294901760
    %656 = vmatpush1.msra.mxu0 %v655
    %657 = vmatprep.subr.mxu0 0.0
    %v658 = vand.u32 %v608, 4294901760
    %659 = vmatpush1.msra.mxu0 %v658
    %660 = vmatprep.subr.mxu0 0.0
    %v661 = vand.u32 %v609, 4294901760
    %662 = vmatpush1.msra.mxu0 %v661
    %663 = vmatprep.subr.mxu0 0.0
    %v664 = vand.u32 %v610, 4294901760
    %665 = vmatpush1.msra.mxu0 %v664
    %666 = vmatprep.subr.mxu0 0.0
    %667 = vmatpush1.msra.mxu0 0.0
    %668 = vmatprep.subr.mxu0 0.0
    %669 = vmatpush1.msra.mxu0 0.0
    %670 = vmatprep.subr.mxu0 0.0
    %671 = vmatpush1.msra.mxu0 0.0
    %672 = vmatprep.subr.mxu0 0.0
    %673 = vmatpush1.msra.mxu0 0.0
    %674 = vmatprep.subr.mxu0 0.0
    %675 = vmatpush1.msra.mxu0 0.0
    %676 = vmatprep.subr.mxu0 0.0
    %677 = vmatpush1.msra.mxu0 0.0
    %678 = vmatprep.subr.mxu0 0.0
    %679 = vmatpush1.msra.mxu0 0.0
    %680 = vmatprep.subr.mxu0 0.0
    %681 = vmatpush1.msra.mxu0 0.0
    %682 = vmatprep.subr.mxu0 0.0
    %683 = vmatpush1.msra.mxu0 0.0
    %684 = vmatprep.subr.mxu0 0.0
    %685 = vmatpush1.msra.mxu0 0.0
    %686 = vmatprep.subr.mxu0 0.0
    %687 = vmatpush1.msra.mxu0 0.0
    %688 = vmatprep.subr.mxu0 0.0
    %689 = vmatpush1.msra.mxu0 0.0
    %690 = vmatprep.subr.mxu0 0.0
    %691 = vmatpush1.msra.mxu0 0.0
    %692 = vmatprep.subr.mxu0 0.0
    %693 = vmatpush1.msra.mxu0 0.0
    %694 = vmatprep.subr.mxu0 0.0
    %695 = vmatpush1.msra.mxu0 0.0
    %696 = vmatprep.subr.mxu0 0.0
    %697 = vmatpush1.msra.mxu0 0.0
    %698 = vmatprep.mubr.f32.mxu0 0.0
    %v699 = vand.u32 %v593, 4294901760
    %v700 = vsub.f32 %v593, %v699
    %v701 = vand.u32 %v700, 4294901760
    %v702 = vsub.f32 %v700, %v701
    %v703 = vand.u32 %v702, 4294901760
    %704 = vmatmul.mubr.f32.gmra.mrb[0].mxu0 %v703
    %v705 = vpop.f32.mrb[0].mxu0
    %v706 = vadd.f32 %v616, %v705
    %v707 = vpop.f32.mrb[0].mxu0
    %708 = vmatprep.mubr.f32.mxu0 0.0
    %v709 = vand.u32 %v594, 4294901760
    %v710 = vsub.f32 %v594, %v709
    %v711 = vand.u32 %v710, 4294901760
    %v712 = vsub.f32 %v710, %v711
    %v713 = vand.u32 %v712, 4294901760
    %714 = vmatmul.mubr.f32.gmra.mrb[0].mxu0 %v713
    %v715 = vpop.f32.mrb[0].mxu0
    %v716 = vadd.f32 %v616, %v715
    %v717 = vpop.f32.mrb[0].mxu0
    %718 = vdwg.mxu0
    %719 = vmatprep.subr.mxu0 0.0
    %v720 = vand.u32 %v595, 4294901760
    %v721 = vsub.f32 %v595, %v720
    %v722 = vand.u32 %v721, 4294901760
    %v723 = vsub.f32 %v721, %v722
    %v724 = vand.u32 %v723, 4294901760
    %725 = vmatpush1.msra.mxu0 %v724
    %726 = vmatprep.subr.mxu0 0.0
    %v727 = vand.u32 %v596, 4294901760
    %v728 = vsub.f32 %v596, %v727
    %v729 = vand.u32 %v728, 4294901760
    %v730 = vsub.f32 %v728, %v729
    %v731 = vand.u32 %v730, 4294901760
    %732 = vmatpush1.msra.mxu0 %v731
    %733 = vmatprep.subr.mxu0 0.0
    %v734 = vand.u32 %v597, 4294901760
    %v735 = vsub.f32 %v597, %v734
    %v736 = vand.u32 %v735, 4294901760
    %v737 = vsub.f32 %v735, %v736
    %v738 = vand.u32 %v737, 4294901760
    %739 = vmatpush1.msra.mxu0 %v738
    %740 = vmatprep.subr.mxu0 0.0
    %v741 = vand.u32 %v598, 4294901760
    %v742 = vsub.f32 %v598, %v741
    %v743 = vand.u32 %v742, 4294901760
    %v744 = vsub.f32 %v742, %v743
    %v745 = vand.u32 %v744, 4294901760
    %746 = vmatpush1.msra.mxu0 %v745
    %747 = vmatprep.subr.mxu0 0.0
    %v748 = vand.u32 %v599, 4294901760
    %v749 = vsub.f32 %v599, %v748
    %v750 = vand.u32 %v749, 4294901760
    %v751 = vsub.f32 %v749, %v750
    %v752 = vand.u32 %v751, 4294901760
    %753 = vmatpush1.msra.mxu0 %v752
    %754 = vmatprep.subr.mxu0 0.0
    %v755 = vand.u32 %v600, 4294901760
    %v756 = vsub.f32 %v600, %v755
    %v757 = vand.u32 %v756, 4294901760
    %v758 = vsub.f32 %v756, %v757
    %v759 = vand.u32 %v758, 4294901760
    %760 = vmatpush1.msra.mxu0 %v759
    %761 = vmatprep.subr.mxu0 0.0
    %v762 = vand.u32 %v601, 4294901760
    %v763 = vsub.f32 %v601, %v762
    %v764 = vand.u32 %v763, 4294901760
    %v765 = vsub.f32 %v763, %v764
    %v766 = vand.u32 %v765, 4294901760
    %767 = vmatpush1.msra.mxu0 %v766
    %768 = vmatprep.subr.mxu0 0.0
    %v769 = vand.u32 %v602, 4294901760
    %v770 = vsub.f32 %v602, %v769
    %v771 = vand.u32 %v770, 4294901760
    %v772 = vsub.f32 %v770, %v771
    %v773 = vand.u32 %v772, 4294901760
    %774 = vmatpush1.msra.mxu0 %v773
    %775 = vmatprep.subr.mxu0 0.0
    %v776 = vand.u32 %v603, 4294901760
    %v777 = vsub.f32 %v603, %v776
    %v778 = vand.u32 %v777, 4294901760
    %v779 = vsub.f32 %v777, %v778
    %v780 = vand.u32 %v779, 4294901760
    %781 = vmatpush1.msra.mxu0 %v780
    %782 = vmatprep.subr.mxu0 0.0
    %v783 = vand.u32 %v604, 4294901760
    %v784 = vsub.f32 %v604, %v783
    %v785 = vand.u32 %v784, 4294901760
    %v786 = vsub.f32 %v784, %v785
    %v787 = vand.u32 %v786, 4294901760
    %788 = vmatpush1.msra.mxu0 %v787
    %789 = vmatprep.subr.mxu0 0.0
    %v790 = vand.u32 %v605, 4294901760
    %v791 = vsub.f32 %v605, %v790
    %v792 = vand.u32 %v791, 4294901760
    %v793 = vsub.f32 %v791, %v792
    %v794 = vand.u32 %v793, 4294901760
    %795 = vmatpush1.msra.mxu0 %v794
    %796 = vmatprep.subr.mxu0 0.0
    %v797 = vand.u32 %v606, 4294901760
    %v798 = vsub.f32 %v606, %v797
    %v799 = vand.u32 %v798, 4294901760
    %v800 = vsub.f32 %v798, %v799
    %v801 = vand.u32 %v800, 4294901760
    %802 = vmatpush1.msra.mxu0 %v801
    %803 = vmatprep.subr.mxu0 0.0
    %v804 = vand.u32 %v607, 4294901760
    %v805 = vsub.f32 %v607, %v804
    %v806 = vand.u32 %v805, 4294901760
    %v807 = vsub.f32 %v805, %v806
    %v808 = vand.u32 %v807, 4294901760
    %809 = vmatpush1.msra.mxu0 %v808
    %810 = vmatprep.subr.mxu0 0.0
    %v811 = vand.u32 %v608, 4294901760
    %v812 = vsub.f32 %v608, %v811
    %v813 = vand.u32 %v812, 4294901760
    %v814 = vsub.f32 %v812, %v813
    %v815 = vand.u32 %v814, 4294901760
    %816 = vmatpush1.msra.mxu0 %v815
    %817 = vmatprep.subr.mxu0 0.0
    %v818 = vand.u32 %v609, 4294901760
    %v819 = vsub.f32 %v609, %v818
    %v820 = vand.u32 %v819, 4294901760
    %v821 = vsub.f32 %v819, %v820
    %v822 = vand.u32 %v821, 4294901760
    %823 = vmatpush1.msra.mxu0 %v822
    %824 = vmatprep.subr.mxu0 0.0
    %v825 = vand.u32 %v610, 4294901760
    %v826 = vsub.f32 %v610, %v825
    %v827 = vand.u32 %v826, 4294901760
    %v828 = vsub.f32 %v826, %v827
    %v829 = vand.u32 %v828, 4294901760
    %830 = vmatpush1.msra.mxu0 %v829
    %831 = vmatprep.subr.mxu0 0.0
    %832 = vmatpush1.msra.mxu0 0.0
    %833 = vmatprep.subr.mxu0 0.0
    %834 = vmatpush1.msra.mxu0 0.0
    %835 = vmatprep.subr.mxu0 0.0
    %836 = vmatpush1.msra.mxu0 0.0
    %837 = vmatprep.subr.mxu0 0.0
    %838 = vmatpush1.msra.mxu0 0.0
    %839 = vmatprep.subr.mxu0 0.0
    %840 = vmatpush1.msra.mxu0 0.0
    %841 = vmatprep.subr.mxu0 0.0
    %842 = vmatpush1.msra.mxu0 0.0
    %843 = vmatprep.subr.mxu0 0.0
    %844 = vmatpush1.msra.mxu0 0.0
    %845 = vmatprep.subr.mxu0 0.0
    %846 = vmatpush1.msra.mxu0 0.0
    %847 = vmatprep.subr.mxu0 0.0
    %848 = vmatpush1.msra.mxu0 0.0
    %849 = vmatprep.subr.mxu0 0.0
    %850 = vmatpush1.msra.mxu0 0.0
    %851 = vmatprep.subr.mxu0 0.0
    %852 = vmatpush1.msra.mxu0 0.0
    %853 = vmatprep.subr.mxu0 0.0
    %854 = vmatpush1.msra.mxu0 0.0
    %855 = vmatprep.subr.mxu0 0.0
    %856 = vmatpush1.msra.mxu0 0.0
    %857 = vmatprep.subr.mxu0 0.0
    %858 = vmatpush1.msra.mxu0 0.0
    %859 = vmatprep.subr.mxu0 0.0
    %860 = vmatpush1.msra.mxu0 0.0
    %861 = vmatprep.subr.mxu0 0.0
    %862 = vmatpush1.msra.mxu0 0.0
    %863 = vmatprep.mubr.f32.mxu0 0.0
    %v864 = vand.u32 %v593, 4294901760
    %865 = vmatmul.mubr.f32.gmra.mrb[0].mxu0 %v864
    %v866 = vpop.f32.mrb[0].mxu0
    %v867 = vadd.f32 %v706, %v866
    %v868 = vpop.f32.mrb[0].mxu0
    %869 = vmatprep.mubr.f32.mxu0 0.0
    %v870 = vand.u32 %v594, 4294901760
    %871 = vmatmul.mubr.f32.gmra.mrb[0].mxu0 %v870
    %v872 = vpop.f32.mrb[0].mxu0
    %v873 = vadd.f32 %v716, %v872
    %v874 = vpop.f32.mrb[0].mxu0
    %875 = vdwg.mxu0
    %876 = vmatprep.subr.mxu0 0.0
    %v877 = vand.u32 %v595, 4294901760
    %v878 = vsub.f32 %v595, %v877
    %879 = vmatpush1.msra.mxu0 %v878
    %880 = vmatprep.subr.mxu0 0.0
    %v881 = vand.u32 %v596, 4294901760
    %v882 = vsub.f32 %v596, %v881
    %883 = vmatpush1.msra.mxu0 %v882
    %884 = vmatprep.subr.mxu0 0.0
    %v885 = vand.u32 %v597, 4294901760
    %v886 = vsub.f32 %v597, %v885
    %887 = vmatpush1.msra.mxu0 %v886
    %888 = vmatprep.subr.mxu0 0.0
    %v889 = vand.u32 %v598, 4294901760
    %v890 = vsub.f32 %v598, %v889
    %891 = vmatpush1.msra.mxu0 %v890
    %892 = vmatprep.subr.mxu0 0.0
    %v893 = vand.u32 %v599, 4294901760
    %v894 = vsub.f32 %v599, %v893
    %895 = vmatpush1.msra.mxu0 %v894
    %896 = vmatprep.subr.mxu0 0.0
    %v897 = vand.u32 %v600, 4294901760
    %v898 = vsub.f32 %v600, %v897
    %899 = vmatpush1.msra.mxu0 %v898
    %900 = vmatprep.subr.mxu0 0.0
    %v901 = vand.u32 %v601, 4294901760
    %v902 = vsub.f32 %v601, %v901
    %903 = vmatpush1.msra.mxu0 %v902
    %904 = vmatprep.subr.mxu0 0.0
    %v905 = vand.u32 %v602, 4294901760
    %v906 = vsub.f32 %v602, %v905
    %907 = vmatpush1.msra.mxu0 %v906
    %908 = vmatprep.subr.mxu0 0.0
    %v909 = vand.u32 %v603, 4294901760
    %v910 = vsub.f32 %v603, %v909
    %911 = vmatpush1.msra.mxu0 %v910
    %912 = vmatprep.subr.mxu0 0.0
    %v913 = vand.u32 %v604, 4294901760
    %v914 = vsub.f32 %v604, %v913
    %915 = vmatpush1.msra.mxu0 %v914
    %916 = vmatprep.subr.mxu0 0.0
    %v917 = vand.u32 %v605, 4294901760
    %v918 = vsub.f32 %v605, %v917
    %919 = vmatpush1.msra.mxu0 %v918
    %920 = vmatprep.subr.mxu0 0.0
    %v921 = vand.u32 %v606, 4294901760
    %v922 = vsub.f32 %v606, %v921
    %923 = vmatpush1.msra.mxu0 %v922
    %924 = vmatprep.subr.mxu0 0.0
    %v925 = vand.u32 %v607, 4294901760
    %v926 = vsub.f32 %v607, %v925
    %927 = vmatpush1.msra.mxu0 %v926
    %928 = vmatprep.subr.mxu0 0.0
    %v929 = vand.u32 %v608, 4294901760
    %v930 = vsub.f32 %v608, %v929
    %931 = vmatpush1.msra.mxu0 %v930
    %932 = vmatprep.subr.mxu0 0.0
    %v933 = vand.u32 %v609, 4294901760
    %v934 = vsub.f32 %v609, %v933
    %935 = vmatpush1.msra.mxu0 %v934
    %936 = vmatprep.subr.mxu0 0.0
    %v937 = vand.u32 %v610, 4294901760
    %v938 = vsub.f32 %v610, %v937
    %939 = vmatpush1.msra.mxu0 %v938
    %940 = vmatprep.subr.mxu0 0.0
    %941 = vmatpush1.msra.mxu0 0.0
    %942 = vmatprep.subr.mxu0 0.0
    %943 = vmatpush1.msra.mxu0 0.0
    %944 = vmatprep.subr.mxu0 0.0
    %945 = vmatpush1.msra.mxu0 0.0
    %946 = vmatprep.subr.mxu0 0.0
    %947 = vmatpush1.msra.mxu0 0.0
    %948 = vmatprep.subr.mxu0 0.0
    %949 = vmatpush1.msra.mxu0 0.0
    %950 = vmatprep.subr.mxu0 0.0
    %951 = vmatpush1.msra.mxu0 0.0
    %952 = vmatprep.subr.mxu0 0.0
    %953 = vmatpush1.msra.mxu0 0.0
    %954 = vmatprep.subr.mxu0 0.0
    %955 = vmatpush1.msra.mxu0 0.0
    %956 = vmatprep.subr.mxu0 0.0
    %957 = vmatpush1.msra.mxu0 0.0
    %958 = vmatprep.subr.mxu0 0.0
    %959 = vmatpush1.msra.mxu0 0.0
    %960 = vmatprep.subr.mxu0 0.0
    %961 = vmatpush1.msra.mxu0 0.0
    %962 = vmatprep.subr.mxu0 0.0
    %963 = vmatpush1.msra.mxu0 0.0
    %964 = vmatprep.subr.mxu0 0.0
    %965 = vmatpush1.msra.mxu0 0.0
    %966 = vmatprep.subr.mxu0 0.0
    %967 = vmatpush1.msra.mxu0 0.0
    %968 = vmatprep.subr.mxu0 0.0
    %969 = vmatpush1.msra.mxu0 0.0
    %970 = vmatprep.subr.mxu0 0.0
    %971 = vmatpush1.msra.mxu0 0.0
    %972 = vmatprep.mubr.f32.mxu0 0.0
    %v973 = vand.u32 %v593, 4294901760
    %v974 = vsub.f32 %v593, %v973
    %975 = vmatmul.mubr.f32.gmra.mrb[0].mxu0 %v974
    %v976 = vpop.f32.mrb[0].mxu0
    %v977 = vadd.f32 %v867, %v976
    %v978 = vpop.f32.mrb[0].mxu0
    %979 = vmatprep.mubr.f32.mxu0 0.0
    %v980 = vand.u32 %v594, 4294901760
    %v981 = vsub.f32 %v594, %v980
    %982 = vmatmul.mubr.f32.gmra.mrb[0].mxu0 %v981
    %v983 = vpop.f32.mrb[0].mxu0
    %v984 = vadd.f32 %v873, %v983
    %v985 = vpop.f32.mrb[0].mxu0
    %986 = vdwg.mxu0
    %987 = vmatprep.subr.mxu0 0.0
    %v988 = vand.u32 %v595, 4294901760
    %989 = vmatpush1.msra.mxu0 %v988
    %990 = vmatprep.subr.mxu0 0.0
    %v991 = vand.u32 %v596, 4294901760
    %992 = vmatpush1.msra.mxu0 %v991
    %993 = vmatprep.subr.mxu0 0.0
    %v994 = vand.u32 %v597, 4294901760
    %995 = vmatpush1.msra.mxu0 %v994
    %996 = vmatprep.subr.mxu0 0.0
    %v997 = vand.u32 %v598, 4294901760
    %998 = vmatpush1.msra.mxu0 %v997
    %999 = vmatprep.subr.mxu0 0.0
    %v1000 = vand.u32 %v599, 4294901760
    %1001 = vmatpush1.msra.mxu0 %v1000
    %1002 = vmatprep.subr.mxu0 0.0
    %v1003 = vand.u32 %v600, 4294901760
    %1004 = vmatpush1.msra.mxu0 %v1003
    %1005 = vmatprep.subr.mxu0 0.0
    %v1006 = vand.u32 %v601, 4294901760
    %1007 = vmatpush1.msra.mxu0 %v1006
    %1008 = vmatprep.subr.mxu0 0.0
    %v1009 = vand.u32 %v602, 4294901760
    %1010 = vmatpush1.msra.mxu0 %v1009
    %1011 = vmatprep.subr.mxu0 0.0
    %v1012 = vand.u32 %v603, 4294901760
    %1013 = vmatpush1.msra.mxu0 %v1012
    %1014 = vmatprep.subr.mxu0 0.0
    %v1015 = vand.u32 %v604, 4294901760
    %1016 = vmatpush1.msra.mxu0 %v1015
    %1017 = vmatprep.subr.mxu0 0.0
    %v1018 = vand.u32 %v605, 4294901760
    %1019 = vmatpush1.msra.mxu0 %v1018
    %1020 = vmatprep.subr.mxu0 0.0
    %v1021 = vand.u32 %v606, 4294901760
    %1022 = vmatpush1.msra.mxu0 %v1021
    %1023 = vmatprep.subr.mxu0 0.0
    %v1024 = vand.u32 %v607, 4294901760
    %1025 = vmatpush1.msra.mxu0 %v1024
    %1026 = vmatprep.subr.mxu0 0.0
    %v1027 = vand.u32 %v608, 4294901760
    %1028 = vmatpush1.msra.mxu0 %v1027
    %1029 = vmatprep.subr.mxu0 0.0
    %v1030 = vand.u32 %v609, 4294901760
    %1031 = vmatpush1.msra.mxu0 %v1030
    %1032 = vmatprep.subr.mxu0 0.0
    %v1033 = vand.u32 %v610, 4294901760
    %1034 = vmatpush1.msra.mxu0 %v1033
    %1035 = vmatprep.subr.mxu0 0.0
    %1036 = vmatpush1.msra.mxu0 0.0
    %1037 = vmatprep.subr.mxu0 0.0
    %1038 = vmatpush1.msra.mxu0 0.0
    %1039 = vmatprep.subr.mxu0 0.0
    %1040 = vmatpush1.msra.mxu0 0.0
    %1041 = vmatprep.subr.mxu0 0.0
    %1042 = vmatpush1.msra.mxu0 0.0
    %1043 = vmatprep.subr.mxu0 0.0
    %1044 = vmatpush1.msra.mxu0 0.0
    %1045 = vmatprep.subr.mxu0 0.0
    %1046 = vmatpush1.msra.mxu0 0.0
    %1047 = vmatprep.subr.mxu0 0.0
    %1048 = vmatpush1.msra.mxu0 0.0
    %1049 = vmatprep.subr.mxu0 0.0
    %1050 = vmatpush1.msra.mxu0 0.0
    %1051 = vmatprep.subr.mxu0 0.0
    %1052 = vmatpush1.msra.mxu0 0.0
    %1053 = vmatprep.subr.mxu0 0.0
    %1054 = vmatpush1.msra.mxu0 0.0
    %1055 = vmatprep.subr.mxu0 0.0
    %1056 = vmatpush1.msra.mxu0 0.0
    %1057 = vmatprep.subr.mxu0 0.0
    %1058 = vmatpush1.msra.mxu0 0.0
    %1059 = vmatprep.subr.mxu0 0.0
    %1060 = vmatpush1.msra.mxu0 0.0
    %1061 = vmatprep.subr.mxu0 0.0
    %1062 = vmatpush1.msra.mxu0 0.0
    %1063 = vmatprep.subr.mxu0 0.0
    %1064 = vmatpush1.msra.mxu0 0.0
    %1065 = vmatprep.subr.mxu0 0.0
    %1066 = vmatpush1.msra.mxu0 0.0
    %1067 = vmatprep.mubr.f32.mxu0 0.0
    %v1068 = vand.u32 %v593, 4294901760
    %v1069 = vsub.f32 %v593, %v1068
    %v1070 = vand.u32 %v1069, 4294901760
    %1071 = vmatmul.mubr.f32.gmra.mrb[0].mxu0 %v1070
    %v1072 = vpop.f32.mrb[0].mxu0
    %v1073 = vadd.f32 %v977, %v1072
    %v1074 = vpop.f32.mrb[0].mxu0
    %1075 = vmatprep.mubr.f32.mxu0 0.0
    %v1076 = vand.u32 %v594, 4294901760
    %v1077 = vsub.f32 %v594, %v1076
    %v1078 = vand.u32 %v1077, 4294901760
    %1079 = vmatmul.mubr.f32.gmra.mrb[0].mxu0 %v1078
    %v1080 = vpop.f32.mrb[0].mxu0
    %v1081 = vadd.f32 %v984, %v1080
    %v1082 = vpop.f32.mrb[0].mxu0
    %1083 = vdwg.mxu0
    %1084 = vmatprep.subr.mxu0 0.0
    %v1085 = vand.u32 %v595, 4294901760
    %v1086 = vsub.f32 %v595, %v1085
    %v1087 = vand.u32 %v1086, 4294901760
    %1088 = vmatpush1.msra.mxu0 %v1087
    %1089 = vmatprep.subr.mxu0 0.0
    %v1090 = vand.u32 %v596, 4294901760
    %v1091 = vsub.f32 %v596, %v1090
    %v1092 = vand.u32 %v1091, 4294901760
    %1093 = vmatpush1.msra.mxu0 %v1092
    %1094 = vmatprep.subr.mxu0 0.0
    %v1095 = vand.u32 %v597, 4294901760
    %v1096 = vsub.f32 %v597, %v1095
    %v1097 = vand.u32 %v1096, 4294901760
    %1098 = vmatpush1.msra.mxu0 %v1097
    %1099 = vmatprep.subr.mxu0 0.0
    %v1100 = vand.u32 %v598, 4294901760
    %v1101 = vsub.f32 %v598, %v1100
    %v1102 = vand.u32 %v1101, 4294901760
    %1103 = vmatpush1.msra.mxu0 %v1102
    %1104 = vmatprep.subr.mxu0 0.0
    %v1105 = vand.u32 %v599, 4294901760
    %v1106 = vsub.f32 %v599, %v1105
    %v1107 = vand.u32 %v1106, 4294901760
    %1108 = vmatpush1.msra.mxu0 %v1107
    %1109 = vmatprep.subr.mxu0 0.0
    %v1110 = vand.u32 %v600, 4294901760
    %v1111 = vsub.f32 %v600, %v1110
    %v1112 = vand.u32 %v1111, 4294901760
    %1113 = vmatpush1.msra.mxu0 %v1112
    %1114 = vmatprep.subr.mxu0 0.0
    %v1115 = vand.u32 %v601, 4294901760
    %v1116 = vsub.f32 %v601, %v1115
    %v1117 = vand.u32 %v1116, 4294901760
    %1118 = vmatpush1.msra.mxu0 %v1117
    %1119 = vmatprep.subr.mxu0 0.0
    %v1120 = vand.u32 %v602, 4294901760
    %v1121 = vsub.f32 %v602, %v1120
    %v1122 = vand.u32 %v1121, 4294901760
    %1123 = vmatpush1.msra.mxu0 %v1122
    %1124 = vmatprep.subr.mxu0 0.0
    %v1125 = vand.u32 %v603, 4294901760
    %v1126 = vsub.f32 %v603, %v1125
    %v1127 = vand.u32 %v1126, 4294901760
    %1128 = vmatpush1.msra.mxu0 %v1127
    %1129 = vmatprep.subr.mxu0 0.0
    %v1130 = vand.u32 %v604, 4294901760
    %v1131 = vsub.f32 %v604, %v1130
    %v1132 = vand.u32 %v1131, 4294901760
    %1133 = vmatpush1.msra.mxu0 %v1132
    %1134 = vmatprep.subr.mxu0 0.0
    %v1135 = vand.u32 %v605, 4294901760
    %v1136 = vsub.f32 %v605, %v1135
    %v1137 = vand.u32 %v1136, 4294901760
    %1138 = vmatpush1.msra.mxu0 %v1137
    %1139 = vmatprep.subr.mxu0 0.0
    %v1140 = vand.u32 %v606, 4294901760
    %v1141 = vsub.f32 %v606, %v1140
    %v1142 = vand.u32 %v1141, 4294901760
    %1143 = vmatpush1.msra.mxu0 %v1142
    %1144 = vmatprep.subr.mxu0 0.0
    %v1145 = vand.u32 %v607, 4294901760
    %v1146 = vsub.f32 %v607, %v1145
    %v1147 = vand.u32 %v1146, 4294901760
    %1148 = vmatpush1.msra.mxu0 %v1147
    %1149 = vmatprep.subr.mxu0 0.0
    %v1150 = vand.u32 %v608, 4294901760
    %v1151 = vsub.f32 %v608, %v1150
    %v1152 = vand.u32 %v1151, 4294901760
    %1153 = vmatpush1.msra.mxu0 %v1152
    %1154 = vmatprep.subr.mxu0 0.0
    %v1155 = vand.u32 %v609, 4294901760
    %v1156 = vsub.f32 %v609, %v1155
    %v1157 = vand.u32 %v1156, 4294901760
    %1158 = vmatpush1.msra.mxu0 %v1157
    %1159 = vmatprep.subr.mxu0 0.0
    %v1160 = vand.u32 %v610, 4294901760
    %v1161 = vsub.f32 %v610, %v1160
    %v1162 = vand.u32 %v1161, 4294901760
    %1163 = vmatpush1.msra.mxu0 %v1162
    %1164 = vmatprep.subr.mxu0 0.0
    %1165 = vmatpush1.msra.mxu0 0.0
    %1166 = vmatprep.subr.mxu0 0.0
    %1167 = vmatpush1.msra.mxu0 0.0
    %1168 = vmatprep.subr.mxu0 0.0
    %1169 = vmatpush1.msra.mxu0 0.0
    %1170 = vmatprep.subr.mxu0 0.0
    %1171 = vmatpush1.msra.mxu0 0.0
    %1172 = vmatprep.subr.mxu0 0.0
    %1173 = vmatpush1.msra.mxu0 0.0
    %1174 = vmatprep.subr.mxu0 0.0
    %1175 = vmatpush1.msra.mxu0 0.0
    %1176 = vmatprep.subr.mxu0 0.0
    %1177 = vmatpush1.msra.mxu0 0.0
    %1178 = vmatprep.subr.mxu0 0.0
    %1179 = vmatpush1.msra.mxu0 0.0
    %1180 = vmatprep.subr.mxu0 0.0
    %1181 = vmatpush1.msra.mxu0 0.0
    %1182 = vmatprep.subr.mxu0 0.0
    %1183 = vmatpush1.msra.mxu0 0.0
    %1184 = vmatprep.subr.mxu0 0.0
    %1185 = vmatpush1.msra.mxu0 0.0
    %1186 = vmatprep.subr.mxu0 0.0
    %1187 = vmatpush1.msra.mxu0 0.0
    %1188 = vmatprep.subr.mxu0 0.0
    %1189 = vmatpush1.msra.mxu0 0.0
    %1190 = vmatprep.subr.mxu0 0.0
    %1191 = vmatpush1.msra.mxu0 0.0
    %1192 = vmatprep.subr.mxu0 0.0
    %1193 = vmatpush1.msra.mxu0 0.0
    %1194 = vmatprep.subr.mxu0 0.0
    %1195 = vmatpush1.msra.mxu0 0.0
    %1196 = vmatprep.mubr.f32.mxu0 0.0
    %v1197 = vand.u32 %v593, 4294901760
    %1198 = vmatmul.mubr.f32.gmra.mrb[0].mxu0 %v1197
    %v1199 = vpop.f32.mrb[0].mxu0
    %v1200 = vadd.f32 %v1073, %v1199
    %v1201 = vpop.f32.mrb[0].mxu0
    %1202 = vmatprep.mubr.f32.mxu0 0.0
    %v1203 = vand.u32 %v594, 4294901760
    %1204 = vmatmul.mubr.f32.gmra.mrb[0].mxu0 %v1203
    %v1205 = vpop.f32.mrb[0].mxu0
    %v1206 = vadd.f32 %v1081, %v1205
    %v1207 = vpop.f32.mrb[0].mxu0
    %1208 = vdwg.mxu0
    %1209 = vmatprep.subr.mxu0 0.0
    %v1210 = vand.u32 %v595, 4294901760
    %1211 = vmatpush1.msra.mxu0 %v1210
    %1212 = vmatprep.subr.mxu0 0.0
    %v1213 = vand.u32 %v596, 4294901760
    %1214 = vmatpush1.msra.mxu0 %v1213
    %1215 = vmatprep.subr.mxu0 0.0
    %v1216 = vand.u32 %v597, 4294901760
    %1217 = vmatpush1.msra.mxu0 %v1216
    %1218 = vmatprep.subr.mxu0 0.0
    %v1219 = vand.u32 %v598, 4294901760
    %1220 = vmatpush1.msra.mxu0 %v1219
    %1221 = vmatprep.subr.mxu0 0.0
    %v1222 = vand.u32 %v599, 4294901760
    %1223 = vmatpush1.msra.mxu0 %v1222
    %1224 = vmatprep.subr.mxu0 0.0
    %v1225 = vand.u32 %v600, 4294901760
    %1226 = vmatpush1.msra.mxu0 %v1225
    %1227 = vmatprep.subr.mxu0 0.0
    %v1228 = vand.u32 %v601, 4294901760
    %1229 = vmatpush1.msra.mxu0 %v1228
    %1230 = vmatprep.subr.mxu0 0.0
    %v1231 = vand.u32 %v602, 4294901760
    %1232 = vmatpush1.msra.mxu0 %v1231
    %1233 = vmatprep.subr.mxu0 0.0
    %v1234 = vand.u32 %v603, 4294901760
    %1235 = vmatpush1.msra.mxu0 %v1234
    %1236 = vmatprep.subr.mxu0 0.0
    %v1237 = vand.u32 %v604, 4294901760
    %1238 = vmatpush1.msra.mxu0 %v1237
    %1239 = vmatprep.subr.mxu0 0.0
    %v1240 = vand.u32 %v605, 4294901760
    %1241 = vmatpush1.msra.mxu0 %v1240
    %1242 = vmatprep.subr.mxu0 0.0
    %v1243 = vand.u32 %v606, 4294901760
    %1244 = vmatpush1.msra.mxu0 %v1243
    %1245 = vmatprep.subr.mxu0 0.0
    %v1246 = vand.u32 %v607, 4294901760
    %1247 = vmatpush1.msra.mxu0 %v1246
    %1248 = vmatprep.subr.mxu0 0.0
    %v1249 = vand.u32 %v608, 4294901760
    %1250 = vmatpush1.msra.mxu0 %v1249
    %1251 = vmatprep.subr.mxu0 0.0
    %v1252 = vand.u32 %v609, 4294901760
    %1253 = vmatpush1.msra.mxu0 %v1252
    %1254 = vmatprep.subr.mxu0 0.0
    %v1255 = vand.u32 %v610, 4294901760
    %1256 = vmatpush1.msra.mxu0 %v1255
    %1257 = vmatprep.subr.mxu0 0.0
    %1258 = vmatpush1.msra.mxu0 0.0
    %1259 = vmatprep.subr.mxu0 0.0
    %1260 = vmatpush1.msra.mxu0 0.0
    %1261 = vmatprep.subr.mxu0 0.0
    %1262 = vmatpush1.msra.mxu0 0.0
    %1263 = vmatprep.subr.mxu0 0.0
    %1264 = vmatpush1.msra.mxu0 0.0
    %1265 = vmatprep.subr.mxu0 0.0
    %1266 = vmatpush1.msra.mxu0 0.0
    %1267 = vmatprep.subr.mxu0 0.0
    %1268 = vmatpush1.msra.mxu0 0.0
    %1269 = vmatprep.subr.mxu0 0.0
    %1270 = vmatpush1.msra.mxu0 0.0
    %1271 = vmatprep.subr.mxu0 0.0
    %1272 = vmatpush1.msra.mxu0 0.0
    %1273 = vmatprep.subr.mxu0 0.0
    %1274 = vmatpush1.msra.mxu0 0.0
    %1275 = vmatprep.subr.mxu0 0.0
    %1276 = vmatpush1.msra.mxu0 0.0
    %1277 = vmatprep.subr.mxu0 0.0
    %1278 = vmatpush1.msra.mxu0 0.0
    %1279 = vmatprep.subr.mxu0 0.0
    %1280 = vmatpush1.msra.mxu0 0.0
    %1281 = vmatprep.subr.mxu0 0.0
    %1282 = vmatpush1.msra.mxu0 0.0
    %1283 = vmatprep.subr.mxu0 0.0
    %1284 = vmatpush1.msra.mxu0 0.0
    %1285 = vmatprep.subr.mxu0 0.0
    %1286 = vmatpush1.msra.mxu0 0.0
    %1287 = vmatprep.subr.mxu0 0.0
    %1288 = vmatpush1.msra.mxu0 0.0
    %1289 = vmatprep.mubr.f32.mxu0 0.0
    %v1290 = vand.u32 %v593, 4294901760
    %1291 = vmatmul.mubr.f32.gmra.mrb[0].mxu0 %v1290
    %v1292 = vpop.f32.mrb[0].mxu0
    %v1293 = vadd.f32 %v1200, %v1292
    %v1294 = vpop.f32.mrb[0].mxu0
    %1295 = vmatprep.mubr.f32.mxu0 0.0
    %v1296 = vand.u32 %v594, 4294901760
    %1297 = vmatmul.mubr.f32.gmra.mrb[0].mxu0 %v1296
    %v1298 = vpop.f32.mrb[0].mxu0
    %v1299 = vadd.f32 %v1206, %v1298
    %v1300 = vpop.f32.mrb[0].mxu0
    %1301 = vdwg.mxu0
    %1302 = vst.msk [vmem:[#allocation2] sm:$0xff] %vm34, %v1293
    %1303 = vst.msk [vmem:[#allocation2 + $0x8] sm:$0xff] %vm34, %v1299
    // Predicated region
    $region22: #{tpu_custom_call.1} parent=1 // pred_check
      _
    $region23: #{tpu_custom_call.1} parent=1 // pred_check_branch
      %1305 = sbr.rel (0) target = $region25
    $region24: #{tpu_custom_call.1} parent=1 // pred_region
      %s1307 = ssub.s32 256, 256
      %1308 = vsyncadd [#allocation3], %s1307
      %s1309 = sshll.u32 [#allocation2], 4
      %s1310 = int_to_ptr.vmem [resolvable:$true] %s1309
      %1315 = dma.vmem_to_hbm [thread:$0]  %s1310, 256, %s5, [#allocation3], 128, 128, 8
    $region25: #{tpu_custom_call.1} parent=1 // pred_fallthru
      _
    // Predicated region
    $region26: #{tpu_custom_call.1} parent=1 // pred_check
      _
    $region27: #{tpu_custom_call.1} parent=1 // pred_check_branch
      %1317 = sbr.rel (0) target = $region29
    $region28: #{tpu_custom_call.1} parent=1 // pred_region
      %1318 = dma.done [#allocation3], 256
    $region29: #{tpu_custom_call.1} parent=1 // pred_fallthru
      _
    %1319 = vsyncpa [#allocation3], 1

</llo_original>
